<compile_context>
chip_gen: v7x
topology: tpu7x:2x2x1
jax: 0.10.0
libtpu: 0.0.40
codegen_flags: <defaults>
</compile_context>

<pallas_src>
import functools

import jax
import jax.numpy as jnp
from jax.experimental import pallas as pl
from jax.experimental.pallas import tpu as pltpu

LANE = 128


def _round_up(x, m):
    return ((x + m - 1) // m) * m


def qnetwork_kernel(x_ref, w1_ref, b1_ref, w2_ref, b2_ref, w3_ref, b3_ref, o_ref):
    """One batch tile of the fused 3-layer MLP.

    x_ref  : (TB, S)              activations in native dtype (cast in-kernel)
    w1_ref : (S, Hp)   w2_ref : (Hp, Hp)   w3_ref : (Hp, A)   in compute dtype
    b*_ref : (1, Hp)/(1, A)       biases in f32 (bias add + ReLU stay on the f32 VPU path)
    o_ref  : (TB, A)              narrow (action_size) f32 output tile
    """
    x = x_ref[...].astype(w1_ref.dtype)            # in-kernel cast; no-op on the f32 path
    h1 = jnp.dot(x, w1_ref[...], preferred_element_type=jnp.float32) + b1_ref[...]
    h1 = jnp.maximum(h1, 0.0).astype(w2_ref.dtype)  # ReLU in f32, back to compute dtype
    h2 = jnp.dot(h1, w2_ref[...], preferred_element_type=jnp.float32) + b2_ref[...]
    h2 = jnp.maximum(h2, 0.0).astype(w3_ref.dtype)
    out = jnp.dot(h2, w3_ref[...], preferred_element_type=jnp.float32) + b3_ref[...]
    o_ref[...] = out.astype(o_ref.dtype)


def prepare_qnetwork_params(w1, b1, w2, b2, w3, b3, compute_dtype=jnp.float32):
    """Pad hidden dim to 128 lanes and cast weights ONCE (call at init, reuse every step).

    Zero-padding is exact: padded hidden columns/rows pass through matmul, bias-add of 0
    and ReLU unchanged, and w3's padded input rows multiply zero activations.
    The output (action) dim is kept at its true width.
    """
    def as2d(b):
        return jnp.asarray(b).reshape(1, -1)

    state_size, hidden = w1.shape
    action_size = w3.shape[1]
    hidden_p = _round_up(hidden, LANE)

    def pad(a, rows, cols):
        return jnp.pad(a, ((0, rows - a.shape[0]), (0, cols - a.shape[1])))

    w1p = pad(w1.astype(compute_dtype), state_size, hidden_p)
    w2p = pad(w2.astype(compute_dtype), hidden_p, hidden_p)
    w3p = pad(w3.astype(compute_dtype), hidden_p, action_size)   # narrow output dim
    b1p = pad(as2d(b1).astype(jnp.float32), 1, hidden_p)
    b2p = pad(as2d(b2).astype(jnp.float32), 1, hidden_p)
    b3p = as2d(b3).astype(jnp.float32)                           # (1, action_size)
    return w1p, b1p, w2p, b2p, w3p, b3p


@functools.partial(jax.jit, static_argnames=("block_batch",))
def qnetwork_forward(x, w1p, b1p, w2p, b2p, w3p, b3p, *, block_batch=4096):
    batch, state_size = x.shape
    hidden_p = w1p.shape[1]
    action_size = w3p.shape[1]

    # Batch tiling. Sublane packing of the x/out blocks (f32 -> 8 rows, bf16 x -> 16).
    sub = 8 if jnp.dtype(x.dtype).itemsize >= 4 else 16
    batch_sub = _round_up(batch, sub)
    tb = min(int(block_batch), batch_sub)
    # Ensure >=2 grid steps when possible so the "parallel" batch axis spans both v7x TCs.
    if tb >= batch_sub and batch_sub >= 2 * sub:
        tb = pl.cdiv(batch_sub, 2)
    tb = _round_up(tb, sub)
    grid_n = pl.cdiv(batch_sub, tb)
    batch_p = grid_n * tb

    # Only the batch dim is padded on the host; no dtype cast of x here (cast is in-kernel).
    xp = jnp.pad(x, ((0, batch_p - batch), (0, 0))) if batch_p != batch else x

    w_item = jnp.dtype(w1p.dtype).itemsize
    flops = 2 * batch_p * (state_size * hidden_p + hidden_p * hidden_p
                           + hidden_p * action_size)
    bytes_accessed = (
        xp.size * jnp.dtype(x.dtype).itemsize
        + (w1p.size + w2p.size + w3p.size) * w_item
        + (b1p.size + b2p.size + b3p.size) * 4
        + batch_p * action_size * 4
    )

    out_p = pl.pallas_call(
        qnetwork_kernel,
        out_shape=jax.ShapeDtypeStruct((batch_p, action_size), jnp.float32),
        grid=(grid_n,),
        in_specs=[
            # Activations: streamed per batch tile (double-buffered by Pallas).
            pl.BlockSpec((tb, state_size), lambda i: (i, 0)),
            # Weights / biases: constant index_map -> fetched once, VMEM-resident.
            pl.BlockSpec((state_size, hidden_p), lambda i: (0, 0)),
            pl.BlockSpec((1, hidden_p), lambda i: (0, 0)),
            pl.BlockSpec((hidden_p, hidden_p), lambda i: (0, 0)),
            pl.BlockSpec((1, hidden_p), lambda i: (0, 0)),
            pl.BlockSpec((hidden_p, action_size), lambda i: (0, 0)),
            pl.BlockSpec((1, action_size), lambda i: (0, 0)),
        ],
        # Narrow (action_size) output block: one contiguous row-major DMA per tile.
        out_specs=pl.BlockSpec((tb, action_size), lambda i: (i, 0)),
        compiler_params=pltpu.CompilerParams(
            dimension_semantics=("parallel",),   # independent batch tiles -> megacore
        ),
        cost_estimate=pl.CostEstimate(
            flops=flops, transcendentals=0, bytes_accessed=bytes_accessed),
    )(xp, w1p, b1p, w2p, b2p, w3p, b3p)

    return out_p[:batch] if batch_p != batch else out_p


def init_linear(key, fan_in, fan_out):
    # Mimic PyTorch nn.Linear default init: U(-1/sqrt(fan_in), 1/sqrt(fan_in)).
    kw, kb = jax.random.split(key)
    bound = 1.0 / jnp.sqrt(float(fan_in))
    w = jax.random.uniform(kw, (fan_in, fan_out), jnp.float32, -bound, bound)
    b = jax.random.uniform(kb, (fan_out,), jnp.float32, -bound, bound)
    return w, b


if __name__ == "__main__":
    # Shapes consistent with the module: state_size=8, hidden=64, action_size=4.
    batch, state_size, hidden_size, action_size = 8, 8, 64, 4

    key = jax.random.PRNGKey(0)
    k_x, k1, k2, k3 = jax.random.split(key, 4)

    x = jax.random.normal(k_x, (batch, state_size), jnp.float32)
    w1, b1 = init_linear(k1, state_size, hidden_size)
    w2, b2 = init_linear(k2, hidden_size, hidden_size)
    w3, b3 = init_linear(k3, hidden_size, action_size)

    # Pure-JAX reference (same math as the PyTorch forward).
    h1 = jnp.maximum(x @ w1 + b1[None, :], 0.0)
    h2 = jnp.maximum(h1 @ w2 + b2[None, :], 0.0)
    ref = h2 @ w3 + b3[None, :]

    # f32 compute path (exact vs reference). Weights padded/cast once at init.
    params_f32 = prepare_qnetwork_params(w1, b1, w2, b2, w3, b3,
                                         compute_dtype=jnp.float32)
    out = qnetwork_forward(x, *params_f32, block_batch=4096)
    out = jax.block_until_ready(out)
    assert out.shape == (batch, action_size)
    assert jnp.allclose(out, ref, atol=1e-5, rtol=1e-5), "f32 kernel mismatch vs reference"

    # bf16 weights path (v6e/v7x): bf16 matmul operands (x cast in-kernel), f32 accumulation.
    params_bf16 = prepare_qnetwork_params(w1, b1, w2, b2, w3, b3,
                                          compute_dtype=jnp.bfloat16)
    out_bf16 = qnetwork_forward(x, *params_bf16, block_batch=4096)
    out_bf16 = jax.block_until_ready(out_bf16)
    assert out_bf16.shape == (batch, action_size)
    assert jnp.allclose(out_bf16, ref, atol=5e-2, rtol=5e-2), "bf16 kernel mismatch vs reference"

    print("KERNEL_OK")
</pallas_src>

<mosaic_0001>
module attributes {stable_mosaic.version = 11 : i64} {
  func.func @qnetwork_kernel(%arg0: i32, %arg1: memref<8x8xf32, #tpu.memory_space<vmem>>, %arg2: memref<8x128xf32, #tpu.memory_space<vmem>>, %arg3: memref<1x128xf32, #tpu.memory_space<vmem>>, %arg4: memref<128x128xf32, #tpu.memory_space<vmem>>, %arg5: memref<1x128xf32, #tpu.memory_space<vmem>>, %arg6: memref<128x4xf32, #tpu.memory_space<vmem>>, %arg7: memref<1x4xf32, #tpu.memory_space<vmem>>, %arg8: memref<8x4xf32, #tpu.memory_space<vmem>>) attributes {dimension_semantics = [#tpu.dimension_semantics<parallel>], iteration_bounds = array<i64: 1>, scalar_prefetch = 0 : i64, scratch_operands = 0 : i64, tpu.core_type = #tpu.core_type<tc>, window_params = [{transform_indices = @transform_0, window_bounds = array<i64: 8, 8>}, {pipeline_mode = #tpu.pipeline_mode<synchronous>, transform_indices = @transform_1, window_bounds = array<i64: 8, 128>}, {pipeline_mode = #tpu.pipeline_mode<synchronous>, transform_indices = @transform_2, window_bounds = array<i64: 1, 128>}, {pipeline_mode = #tpu.pipeline_mode<synchronous>, transform_indices = @transform_3, window_bounds = array<i64: 128, 128>}, {pipeline_mode = #tpu.pipeline_mode<synchronous>, transform_indices = @transform_4, window_bounds = array<i64: 1, 128>}, {pipeline_mode = #tpu.pipeline_mode<synchronous>, transform_indices = @transform_5, window_bounds = array<i64: 128, 4>}, {pipeline_mode = #tpu.pipeline_mode<synchronous>, transform_indices = @transform_6, window_bounds = array<i64: 1, 4>}, {transform_indices = @transform_7, window_bounds = array<i64: 8, 4>}]} {
    %c0 = arith.constant 0 : index
    %c0_0 = arith.constant 0 : index
    %0 = vector.load %arg1[%c0, %c0_0] : memref<8x8xf32, #tpu.memory_space<vmem>>, vector<8x8xf32>
    %c0_1 = arith.constant 0 : index
    %c0_2 = arith.constant 0 : index
    %1 = vector.load %arg2[%c0_1, %c0_2] : memref<8x128xf32, #tpu.memory_space<vmem>>, vector<8x128xf32>
    %cst = arith.constant dense<0.000000e+00> : vector<8x128xf32>
    %2 = tpu.matmul %0, %1, %cst {dimension_numbers = #tpu.dot_dimension_numbers<[1], [0], [0], [1], [0, 0, 1, 1], [], []>} : vector<8x8xf32>, vector<8x128xf32>, vector<8x128xf32> -> vector<8x128xf32>
    %c0_3 = arith.constant 0 : index
    %c0_4 = arith.constant 0 : index
    %3 = vector.load %arg3[%c0_3, %c0_4] : memref<1x128xf32, #tpu.memory_space<vmem>>, vector<1x128xf32>
    %4 = vector.broadcast %3 : vector<1x128xf32> to vector<8x128xf32>
    %5 = arith.addf %2, %4 : vector<8x128xf32>
    %cst_5 = arith.constant 0.000000e+00 : f32
    %6 = vector.broadcast %cst_5 : f32 to vector<8x128xf32>
    %7 = arith.maximumf %5, %6 : vector<8x128xf32>
    %c0_6 = arith.constant 0 : index
    %c0_7 = arith.constant 0 : index
    %8 = vector.load %arg4[%c0_6, %c0_7] : memref<128x128xf32, #tpu.memory_space<vmem>>, vector<128x128xf32>
    %cst_8 = arith.constant dense<0.000000e+00> : vector<8x128xf32>
    %9 = tpu.matmul %7, %8, %cst_8 {dimension_numbers = #tpu.dot_dimension_numbers<[1], [0], [0], [1], [0, 0, 1, 1], [], []>} : vector<8x128xf32>, vector<128x128xf32>, vector<8x128xf32> -> vector<8x128xf32>
    %c0_9 = arith.constant 0 : index
    %c0_10 = arith.constant 0 : index
    %10 = vector.load %arg5[%c0_9, %c0_10] : memref<1x128xf32, #tpu.memory_space<vmem>>, vector<1x128xf32>
    %11 = vector.broadcast %10 : vector<1x128xf32> to vector<8x128xf32>
    %12 = arith.addf %9, %11 : vector<8x128xf32>
    %cst_11 = arith.constant 0.000000e+00 : f32
    %13 = vector.broadcast %cst_11 : f32 to vector<8x128xf32>
    %14 = arith.maximumf %12, %13 : vector<8x128xf32>
    %c0_12 = arith.constant 0 : index
    %c0_13 = arith.constant 0 : index
    %15 = vector.load %arg6[%c0_12, %c0_13] : memref<128x4xf32, #tpu.memory_space<vmem>>, vector<128x4xf32>
    %cst_14 = arith.constant dense<0.000000e+00> : vector<8x4xf32>
    %16 = tpu.matmul %14, %15, %cst_14 {dimension_numbers = #tpu.dot_dimension_numbers<[1], [0], [0], [1], [0, 0, 1, 1], [], []>} : vector<8x128xf32>, vector<128x4xf32>, vector<8x4xf32> -> vector<8x4xf32>
    %c0_15 = arith.constant 0 : index
    %c0_16 = arith.constant 0 : index
    %17 = vector.load %arg7[%c0_15, %c0_16] : memref<1x4xf32, #tpu.memory_space<vmem>>, vector<1x4xf32>
    %18 = vector.broadcast %17 : vector<1x4xf32> to vector<8x4xf32>
    %19 = arith.addf %16, %18 : vector<8x4xf32>
    %c0_17 = arith.constant 0 : index
    %c0_18 = arith.constant 0 : index
    %20 = vector.load %arg8[%c0_17, %c0_18] : memref<8x4xf32, #tpu.memory_space<vmem>>, vector<8x4xf32>
    tpu.vector_store %arg8[%c0_17, %c0_18], %19 {strides = array<i32>} : memref<8x4xf32, #tpu.memory_space<vmem>>, vector<8x4xf32>,
    return
  }
  func.func @transform_0(%arg0: i32) -> (i32, i32) {
    %c0_i32 = arith.constant 0 : i32
    %c0_i32_0 = arith.constant 0 : i32
    return %arg0, %c0_i32 : i32, i32
  }
  func.func @transform_1(%arg0: i32) -> (i32, i32) {
    %c0_i32 = arith.constant 0 : i32
    %c0_i32_0 = arith.constant 0 : i32
    %c0_i32_1 = arith.constant 0 : i32
    return %c0_i32, %c0_i32_0 : i32, i32
  }
  func.func @transform_2(%arg0: i32) -> (i32, i32) {
    %c0_i32 = arith.constant 0 : i32
    %c0_i32_0 = arith.constant 0 : i32
    %c0_i32_1 = arith.constant 0 : i32
    return %c0_i32, %c0_i32_0 : i32, i32
  }
  func.func @transform_3(%arg0: i32) -> (i32, i32) {
    %c0_i32 = arith.constant 0 : i32
    %c0_i32_0 = arith.constant 0 : i32
    %c0_i32_1 = arith.constant 0 : i32
    return %c0_i32, %c0_i32_0 : i32, i32
  }
  func.func @transform_4(%arg0: i32) -> (i32, i32) {
    %c0_i32 = arith.constant 0 : i32
    %c0_i32_0 = arith.constant 0 : i32
    %c0_i32_1 = arith.constant 0 : i32
    return %c0_i32, %c0_i32_0 : i32, i32
  }
  func.func @transform_5(%arg0: i32) -> (i32, i32) {
    %c0_i32 = arith.constant 0 : i32
    %c0_i32_0 = arith.constant 0 : i32
    %c0_i32_1 = arith.constant 0 : i32
    return %c0_i32, %c0_i32_0 : i32, i32
  }
  func.func @transform_6(%arg0: i32) -> (i32, i32) {
    %c0_i32 = arith.constant 0 : i32
    %c0_i32_0 = arith.constant 0 : i32
    %c0_i32_1 = arith.constant 0 : i32
    return %c0_i32, %c0_i32_0 : i32, i32
  }
  func.func @transform_7(%arg0: i32) -> (i32, i32) {
    %c0_i32 = arith.constant 0 : i32
    %c0_i32_0 = arith.constant 0 : i32
    return %arg0, %c0_i32 : i32, i32
  }
}

</mosaic_0001>

<llo_original>
// kernel: qnetwork_forward.1
$region0: #{qnetwork_forward.1}
  #allocation0 [shape = 'u32[]', space=smem, size = 0x4, offset = 0x4, fixed_abs, tag = 'smem constant byte address 0x4 - core index']
  #allocation1 [shape = 'u32[144,128]{1,0:T(1,128)}', space=vmem, size = 0x12000, scoped, tag = 'internal scratch']
  %s0 = inlined_call_operand.vmem [shape: f32[8,8], index: 0, kind: input, shape index: {}]
  %s1 = inlined_call_operand.hbm [shape: f32[8,128], index: 1, kind: input, shape index: {}]
  %s2 = inlined_call_operand.vmem [shape: f32[1,128], index: 2, kind: input, shape index: {}]
  %s3 = inlined_call_operand.vmem [shape: f32[128,128], index: 3, kind: input, shape index: {}]
  %s4 = inlined_call_operand.vmem [shape: f32[1,128], index: 4, kind: input, shape index: {}]
  %s5 = inlined_call_operand.vmem [shape: f32[128,4], index: 5, kind: input, shape index: {}]
  %s6 = inlined_call_operand.vmem [shape: f32[1,4], index: 6, kind: input, shape index: {}]
  %s7 = inlined_call_operand.vmem [shape: f32[8,4], index: 7, kind: output, shape index: {}]
  %s8 = sld [smem:[#allocation0]]
  $region42: #{qnetwork_forward.1} parent=0
    _
  %s10 = ssub.s32 1, %s8
  %s11 = scalar_select 0, %s10, %s8
  $region1: #{qnetwork_forward.1} parent=0
    #allocation2 [shape = 'u8[4096]{0}', space=vmem, size = 0x1000, scoped, tag = 'input window, operand 1, single buffered']
    #allocation3 [shape = 's32[1]{0}', space=sflag, size = 0x4, scoped, tag = 'scoped memory for qnetwork_forward.1']
    %12 = vsyncpa [#allocation3], 0
    // Predicated region
    $region2: #{qnetwork_forward.1} parent=1 // pred_check
      _
    $region3: #{qnetwork_forward.1} parent=1 // pred_check_branch
      %14 = sbr.rel (0) target = $region5
    $region4: #{qnetwork_forward.1} parent=1 // pred_region
      _
    $region5: #{qnetwork_forward.1} parent=1 // pred_fallthru
      _
    // Predicated region
    $region6: #{qnetwork_forward.1} parent=1 // pred_check
      _
    $region7: #{qnetwork_forward.1} parent=1 // pred_check_branch
      %16 = sbr.rel (0) target = $region9
    $region8: #{qnetwork_forward.1} parent=1 // pred_region
      %s18 = ssub.s32 128, 128
      %19 = vsyncadd [#allocation3], %s18
      %s21 = sshll.u32 [#allocation2], 4
      %s22 = int_to_ptr.vmem [resolvable:$true] %s21
      %24 = dma.hbm_to_vmem [thread:$0]  %s1, 128, %s22, [#allocation3]
    $region9: #{qnetwork_forward.1} parent=1 // pred_fallthru
      _
    // Predicated region
    $region10: #{qnetwork_forward.1} parent=1 // pred_check
      _
    $region11: #{qnetwork_forward.1} parent=1 // pred_check_branch
      %26 = sbr.rel (0) target = $region13
    $region12: #{qnetwork_forward.1} parent=1 // pred_region
      _
    $region13: #{qnetwork_forward.1} parent=1 // pred_fallthru
      _
    // Predicated region
    $region14: #{qnetwork_forward.1} parent=1 // pred_check
      _
    $region15: #{qnetwork_forward.1} parent=1 // pred_check_branch
      %28 = sbr.rel (0) target = $region17
    $region16: #{qnetwork_forward.1} parent=1 // pred_region
      _
    $region17: #{qnetwork_forward.1} parent=1 // pred_fallthru
      _
    // Predicated region
    $region18: #{qnetwork_forward.1} parent=1 // pred_check
      _
    $region19: #{qnetwork_forward.1} parent=1 // pred_check_branch
      %30 = sbr.rel (0) target = $region21
    $region20: #{qnetwork_forward.1} parent=1 // pred_region
      _
    $region21: #{qnetwork_forward.1} parent=1 // pred_fallthru
      _
    // Predicated region
    $region22: #{qnetwork_forward.1} parent=1 // pred_check
      _
    $region23: #{qnetwork_forward.1} parent=1 // pred_check_branch
      %32 = sbr.rel (0) target = $region25
    $region24: #{qnetwork_forward.1} parent=1 // pred_region
      _
    $region25: #{qnetwork_forward.1} parent=1 // pred_fallthru
      _
    // Predicated region
    $region26: #{qnetwork_forward.1} parent=1 // pred_check
      _
    $region27: #{qnetwork_forward.1} parent=1 // pred_check_branch
      %34 = sbr.rel (0) target = $region29
    $region28: #{qnetwork_forward.1} parent=1 // pred_region
      _
    $region29: #{qnetwork_forward.1} parent=1 // pred_fallthru
      _
    // Predicated region
    $region30: #{qnetwork_forward.1} parent=1 // pred_check
      _
    $region31: #{qnetwork_forward.1} parent=1 // pred_check_branch
      %36 = sbr.rel (0) target = $region33
    $region32: #{qnetwork_forward.1} parent=1 // pred_region
      %37 = dma.done [#allocation3], 128
    $region33: #{qnetwork_forward.1} parent=1 // pred_fallthru
      _
    %v38 = vld [vmem:[%s0] sm:$0xff]
    %v39 = vld [vmem:[#allocation2] sm:$0xff]
    %v40 = vld [vmem:[%s2] sm:$0x1]
    %v42 = vlaneseq
    %v43 = vshrl.u32 %v42, 7
    %v44 = vsub.s32 0, %v43
    %v45 = vrot.slane %v40, %v44
    %vm47 = vcmask 64512
    %v49 = vsel %vm47, %v38, 0
    %51 = vmatprep.subr.mxu0 0.0
    %52 = vmatpush1.msra.mxu0 %v39
    %53 = vmatprep.subr.mxu0 0.0
    %54 = vmatpush1.msra.mxu0 0.0
    %55 = vmatprep.subr.mxu0 0.0
    %56 = vmatpush1.msra.mxu0 0.0
    %57 = vmatprep.subr.mxu0 0.0
    %58 = vmatpush1.msra.mxu0 0.0
    %59 = vmatprep.subr.mxu0 0.0
    %60 = vmatpush1.msra.mxu0 0.0
    %61 = vmatprep.subr.mxu0 0.0
    %62 = vmatpush1.msra.mxu0 0.0
    %63 = vmatprep.subr.mxu0 0.0
    %64 = vmatpush1.msra.mxu0 0.0
    %65 = vmatprep.subr.mxu0 0.0
    %66 = vmatpush1.msra.mxu0 0.0
    %67 = vmatprep.subr.mxu0 0.0
    %68 = vmatpush1.msra.mxu0 0.0
    %69 = vmatprep.subr.mxu0 0.0
    %70 = vmatpush1.msra.mxu0 0.0
    %71 = vmatprep.subr.mxu0 0.0
    %72 = vmatpush1.msra.mxu0 0.0
    %73 = vmatprep.subr.mxu0 0.0
    %74 = vmatpush1.msra.mxu0 0.0
    %75 = vmatprep.subr.mxu0 0.0
    %76 = vmatpush1.msra.mxu0 0.0
    %77 = vmatprep.subr.mxu0 0.0
    %78 = vmatpush1.msra.mxu0 0.0
    %79 = vmatprep.subr.mxu0 0.0
    %80 = vmatpush1.msra.mxu0 0.0
    %81 = vmatprep.subr.mxu0 0.0
    %82 = vmatpush1.msra.mxu0 0.0
    %83 = vmatprep.subr.mxu0 0.0
    %84 = vmatpush1.msra.mxu0 0.0
    %85 = vmatprep.subr.mxu0 0.0
    %86 = vmatpush1.msra.mxu0 0.0
    %87 = vmatprep.subr.mxu0 0.0
    %88 = vmatpush1.msra.mxu0 0.0
    %89 = vmatprep.subr.mxu0 0.0
    %90 = vmatpush1.msra.mxu0 0.0
    %91 = vmatprep.subr.mxu0 0.0
    %92 = vmatpush1.msra.mxu0 0.0
    %93 = vmatprep.subr.mxu0 0.0
    %94 = vmatpush1.msra.mxu0 0.0
    %95 = vmatprep.subr.mxu0 0.0
    %96 = vmatpush1.msra.mxu0 0.0
    %97 = vmatprep.subr.mxu0 0.0
    %98 = vmatpush1.msra.mxu0 0.0
    %99 = vmatprep.subr.mxu0 0.0
    %100 = vmatpush1.msra.mxu0 0.0
    %101 = vmatprep.subr.mxu0 0.0
    %102 = vmatpush1.msra.mxu0 0.0
    %103 = vmatprep.subr.mxu0 0.0
    %104 = vmatpush1.msra.mxu0 0.0
    %105 = vmatprep.subr.mxu0 0.0
    %106 = vmatpush1.msra.mxu0 0.0
    %107 = vmatprep.subr.mxu0 0.0
    %108 = vmatpush1.msra.mxu0 0.0
    %109 = vmatprep.subr.mxu0 0.0
    %110 = vmatpush1.msra.mxu0 0.0
    %111 = vmatprep.subr.mxu0 0.0
    %112 = vmatpush1.msra.mxu0 0.0
    %113 = vmatprep.subr.mxu0 0.0
    %114 = vmatpush1.msra.mxu0 0.0
    %115 = vmatprep.mubr.f32.mxu0 0.0
    %116 = vmatmul.mubr.f32.gmra.mrb[0].mxu0 %v49
    %v117 = vpop.f32.mrb[0].mxu0
    %v118 = vadd.f32 %v45, %v117
    %v119 = vpop.f32.mrb[0].mxu0
    %120 = vdwg.mxu0
    %v121 = vmax.f32 %v118, 0.0
    %v122 = vld [vmem:[%s3] sm:$0xff]
    %v123 = vld [vmem:[%s3 + $0x8] sm:$0xff]
    %v124 = vld [vmem:[%s3 + $0x10] sm:$0xff]
    %v125 = vld [vmem:[%s3 + $0x18] sm:$0xff]
    %v126 = vld [vmem:[%s3 + $0x20] sm:$0xff]
    %v127 = vld [vmem:[%s3 + $0x28] sm:$0xff]
    %v128 = vld [vmem:[%s3 + $0x30] sm:$0xff]
    %v129 = vld [vmem:[%s3 + $0x38] sm:$0xff]
    %v130 = vld [vmem:[%s3 + $0x40] sm:$0xff]
    %v131 = vld [vmem:[%s3 + $0x48] sm:$0xff]
    %v132 = vld [vmem:[%s3 + $0x50] sm:$0xff]
    %v133 = vld [vmem:[%s3 + $0x58] sm:$0xff]
    %v134 = vld [vmem:[%s3 + $0x60] sm:$0xff]
    %v135 = vld [vmem:[%s3 + $0x68] sm:$0xff]
    %v136 = vld [vmem:[%s3 + $0x70] sm:$0xff]
    %v137 = vld [vmem:[%s3 + $0x78] sm:$0xff]
    %v138 = vld [vmem:[%s4] sm:$0x1]
    %v140 = vlaneseq
    %v141 = vshrl.u32 %v140, 7
    %v142 = vsub.s32 0, %v141
    %v143 = vrot.slane %v138, %v142
    %145 = vmatprep.subr.mxu0 0.0
    %146 = vmatpush1.msra.mxu0 %v122
    %147 = vmatprep.subr.mxu0 0.0
    %148 = vmatpush1.msra.mxu0 %v123
    %149 = vmatprep.subr.mxu0 0.0
    %150 = vmatpush1.msra.mxu0 %v124
    %151 = vmatprep.subr.mxu0 0.0
    %152 = vmatpush1.msra.mxu0 %v125
    %153 = vmatprep.subr.mxu0 0.0
    %154 = vmatpush1.msra.mxu0 %v126
    %155 = vmatprep.subr.mxu0 0.0
    %156 = vmatpush1.msra.mxu0 %v127
    %157 = vmatprep.subr.mxu0 0.0
    %158 = vmatpush1.msra.mxu0 %v128
    %159 = vmatprep.subr.mxu0 0.0
    %160 = vmatpush1.msra.mxu0 %v129
    %161 = vmatprep.subr.mxu0 0.0
    %162 = vmatpush1.msra.mxu0 %v130
    %163 = vmatprep.subr.mxu0 0.0
    %164 = vmatpush1.msra.mxu0 %v131
    %165 = vmatprep.subr.mxu0 0.0
    %166 = vmatpush1.msra.mxu0 %v132
    %167 = vmatprep.subr.mxu0 0.0
    %168 = vmatpush1.msra.mxu0 %v133
    %169 = vmatprep.subr.mxu0 0.0
    %170 = vmatpush1.msra.mxu0 %v134
    %171 = vmatprep.subr.mxu0 0.0
    %172 = vmatpush1.msra.mxu0 %v135
    %173 = vmatprep.subr.mxu0 0.0
    %174 = vmatpush1.msra.mxu0 %v136
    %175 = vmatprep.subr.mxu0 0.0
    %176 = vmatpush1.msra.mxu0 %v137
    %177 = vmatprep.subr.mxu0 0.0
    %178 = vmatpush1.msra.mxu0 0.0
    %179 = vmatprep.subr.mxu0 0.0
    %180 = vmatpush1.msra.mxu0 0.0
    %181 = vmatprep.subr.mxu0 0.0
    %182 = vmatpush1.msra.mxu0 0.0
    %183 = vmatprep.subr.mxu0 0.0
    %184 = vmatpush1.msra.mxu0 0.0
    %185 = vmatprep.subr.mxu0 0.0
    %186 = vmatpush1.msra.mxu0 0.0
    %187 = vmatprep.subr.mxu0 0.0
    %188 = vmatpush1.msra.mxu0 0.0
    %189 = vmatprep.subr.mxu0 0.0
    %190 = vmatpush1.msra.mxu0 0.0
    %191 = vmatprep.subr.mxu0 0.0
    %192 = vmatpush1.msra.mxu0 0.0
    %193 = vmatprep.subr.mxu0 0.0
    %194 = vmatpush1.msra.mxu0 0.0
    %195 = vmatprep.subr.mxu0 0.0
    %196 = vmatpush1.msra.mxu0 0.0
    %197 = vmatprep.subr.mxu0 0.0
    %198 = vmatpush1.msra.mxu0 0.0
    %199 = vmatprep.subr.mxu0 0.0
    %200 = vmatpush1.msra.mxu0 0.0
    %201 = vmatprep.subr.mxu0 0.0
    %202 = vmatpush1.msra.mxu0 0.0
    %203 = vmatprep.subr.mxu0 0.0
    %204 = vmatpush1.msra.mxu0 0.0
    %205 = vmatprep.subr.mxu0 0.0
    %206 = vmatpush1.msra.mxu0 0.0
    %207 = vmatprep.subr.mxu0 0.0
    %208 = vmatpush1.msra.mxu0 0.0
    %209 = vmatprep.mubr.f32.mxu0 0.0
    %210 = vmatmul.mubr.f32.gmra.mrb[0].mxu0 %v121
    %v211 = vpop.f32.mrb[0].mxu0
    %v212 = vadd.f32 %v143, %v211
    %v213 = vpop.f32.mrb[0].mxu0
    %214 = vdwg.mxu0
    %v215 = vmax.f32 %v212, 0.0
    %v216 = vld [vmem:[%s5] sm:$0xff]
    %v217 = vld [vmem:[%s5 + $0x8] sm:$0xff]
    %v218 = vld [vmem:[%s5 + $0x10] sm:$0xff]
    %v219 = vld [vmem:[%s5 + $0x18] sm:$0xff]
    %v220 = vld [vmem:[%s5 + $0x20] sm:$0xff]
    %v221 = vld [vmem:[%s5 + $0x28] sm:$0xff]
    %v222 = vld [vmem:[%s5 + $0x30] sm:$0xff]
    %v223 = vld [vmem:[%s5 + $0x38] sm:$0xff]
    %v224 = vld [vmem:[%s5 + $0x40] sm:$0xff]
    %v225 = vld [vmem:[%s5 + $0x48] sm:$0xff]
    %v226 = vld [vmem:[%s5 + $0x50] sm:$0xff]
    %v227 = vld [vmem:[%s5 + $0x58] sm:$0xff]
    %v228 = vld [vmem:[%s5 + $0x60] sm:$0xff]
    %v229 = vld [vmem:[%s5 + $0x68] sm:$0xff]
    %v230 = vld [vmem:[%s5 + $0x70] sm:$0xff]
    %v231 = vld [vmem:[%s5 + $0x78] sm:$0xff]
    %v232 = vld [vmem:[%s6] sm:$0x1]
    %v234 = vlaneseq
    %v235 = vshrl.u32 %v234, 7
    %v236 = vsub.s32 0, %v235
    %v237 = vrot.slane %v232, %v236
    %239 = vmatprep.subr.mxu0 0.0
    %240 = vmatpush1.msra.mxu0 %v216
    %241 = vmatprep.subr.mxu0 0.0
    %242 = vmatpush1.msra.mxu0 %v217
    %243 = vmatprep.subr.mxu0 0.0
    %244 = vmatpush1.msra.mxu0 %v218
    %245 = vmatprep.subr.mxu0 0.0
    %246 = vmatpush1.msra.mxu0 %v219
    %247 = vmatprep.subr.mxu0 0.0
    %248 = vmatpush1.msra.mxu0 %v220
    %249 = vmatprep.subr.mxu0 0.0
    %250 = vmatpush1.msra.mxu0 %v221
    %251 = vmatprep.subr.mxu0 0.0
    %252 = vmatpush1.msra.mxu0 %v222
    %253 = vmatprep.subr.mxu0 0.0
    %254 = vmatpush1.msra.mxu0 %v223
    %255 = vmatprep.subr.mxu0 0.0
    %256 = vmatpush1.msra.mxu0 %v224
    %257 = vmatprep.subr.mxu0 0.0
    %258 = vmatpush1.msra.mxu0 %v225
    %259 = vmatprep.subr.mxu0 0.0
    %260 = vmatpush1.msra.mxu0 %v226
    %261 = vmatprep.subr.mxu0 0.0
    %262 = vmatpush1.msra.mxu0 %v227
    %263 = vmatprep.subr.mxu0 0.0
    %264 = vmatpush1.msra.mxu0 %v228
    %265 = vmatprep.subr.mxu0 0.0
    %266 = vmatpush1.msra.mxu0 %v229
    %267 = vmatprep.subr.mxu0 0.0
    %268 = vmatpush1.msra.mxu0 %v230
    %269 = vmatprep.subr.mxu0 0.0
    %270 = vmatpush1.msra.mxu0 %v231
    %271 = vmatprep.subr.mxu0 0.0
    %272 = vmatpush1.msra.mxu0 0.0
    %273 = vmatprep.subr.mxu0 0.0
    %274 = vmatpush1.msra.mxu0 0.0
    %275 = vmatprep.subr.mxu0 0.0
    %276 = vmatpush1.msra.mxu0 0.0
    %277 = vmatprep.subr.mxu0 0.0
    %278 = vmatpush1.msra.mxu0 0.0
    %279 = vmatprep.subr.mxu0 0.0
    %280 = vmatpush1.msra.mxu0 0.0
    %281 = vmatprep.subr.mxu0 0.0
    %282 = vmatpush1.msra.mxu0 0.0
    %283 = vmatprep.subr.mxu0 0.0
    %284 = vmatpush1.msra.mxu0 0.0
    %285 = vmatprep.subr.mxu0 0.0
    %286 = vmatpush1.msra.mxu0 0.0
    %287 = vmatprep.subr.mxu0 0.0
    %288 = vmatpush1.msra.mxu0 0.0
    %289 = vmatprep.subr.mxu0 0.0
    %290 = vmatpush1.msra.mxu0 0.0
    %291 = vmatprep.subr.mxu0 0.0
    %292 = vmatpush1.msra.mxu0 0.0
    %293 = vmatprep.subr.mxu0 0.0
    %294 = vmatpush1.msra.mxu0 0.0
    %295 = vmatprep.subr.mxu0 0.0
    %296 = vmatpush1.msra.mxu0 0.0
    %297 = vmatprep.subr.mxu0 0.0
    %298 = vmatpush1.msra.mxu0 0.0
    %299 = vmatprep.subr.mxu0 0.0
    %300 = vmatpush1.msra.mxu0 0.0
    %301 = vmatprep.subr.mxu0 0.0
    %302 = vmatpush1.msra.mxu0 0.0
    %303 = vmatprep.mubr.f32.mxu0 0.0
    %304 = vmatmul.mubr.f32.gmra.mrb[0].mxu0 %v215
    %v305 = vpop.f32.mrb[0].mxu0
    %v306 = vadd.f32 %v237, %v305
    %v307 = vpop.f32.mrb[0].mxu0
    %308 = vdwg.mxu0
    %vm309 = vcmask 31744
    %310 = vst.msk [vmem:[%s7] sm:$0xff] %vm309, %v306
    // Predicated region
    $region34: #{qnetwork_forward.1} parent=1 // pred_check
      _
    $region35: #{qnetwork_forward.1} parent=1 // pred_check_branch
      %312 = sbr.rel (0) target = $region37
    $region36: #{qnetwork_forward.1} parent=1 // pred_region
      _
    $region37: #{qnetwork_forward.1} parent=1 // pred_fallthru
      _
    // Predicated region
    $region38: #{qnetwork_forward.1} parent=1 // pred_check
      _
    $region39: #{qnetwork_forward.1} parent=1 // pred_check_branch
      %314 = sbr.rel (0) target = $region41
    $region40: #{qnetwork_forward.1} parent=1 // pred_region
      _
    $region41: #{qnetwork_forward.1} parent=1 // pred_fallthru
      _
    %315 = vsyncpa [#allocation3], 1

</llo_original>
